<compile_context>
chip_gen: v5e
topology: v5e:2x2
jax: 0.10.0
libtpu: 0.0.40
codegen_flags: <defaults>
</compile_context>

<pallas_src>
import functools

import jax
import jax.numpy as jnp
from jax.experimental import pallas as pl
from jax.experimental.pallas import tpu as pltpu


def _pose_loss_kernel(scalars_ref, pred_ref, tgt_ref, loss_ref, loss_q_ref,
                      acc_ref, *, total_rows, block_rows, dim, mask_tail):
    i = pl.program_id(0)

    @pl.when(i == 0)
    def _init():
        acc_ref[...] = jnp.zeros_like(acc_ref)

    pred = pred_ref[...].astype(jnp.float32)          # (block_rows, 128)
    tgt = tgt_ref[...].astype(jnp.float32)
    shape = pred.shape

    if mask_tail:
        # Rows past the end of the array hold unspecified data (Pallas pads the
        # last partial block); zero them BEFORE any arithmetic so no NaN/Inf
        # can leak into the accumulation.  Zero rows contribute exactly 0.
        row = jax.lax.broadcasted_iota(jnp.int32, shape, 0) + i * block_rows
        valid = row < total_rows
        pred = jnp.where(valid, pred, 0.0)
        tgt = jnp.where(valid, tgt, 0.0)

    # ---- F.normalize(pred, p=2, dim=1) in the lane-flat layout --------------
    # Each sample's `dim` components occupy `dim` consecutive lanes of one row.
    # Build the per-sample sum of squares, broadcast to all of its lanes, with
    # a log2(dim)-step lane butterfly (pltpu.roll on the XLU).
    lane = jax.lax.broadcasted_iota(jnp.int32, shape, 1)

    # 1-vreg probe: make the butterfly correct regardless of the roll-direction
    # convention of pltpu.roll (jnp.roll-like or the opposite).
    lane8 = jax.lax.broadcasted_iota(jnp.int32, (8, 128), 1)
    probe = pltpu.roll(lane8, 1, 1)
    rolls_like_jnp = probe[0:1, 0:1] == 127                     # (1, 1) bool

    sumsq = pred * pred
    step = 1
    while step < dim:
        fwd = pltpu.roll(sumsq, 128 - step, 1)   # x[lane+step] if jnp-like
        bwd = pltpu.roll(sumsq, step, 1)         # x[lane-step] if jnp-like
        low = (lane % (2 * step)) < step         # lower half of each group
        sel = low == rolls_like_jnp              # flip selection if direction
        sumsq = sumsq + jnp.where(sel, fwd, bwd) # is the opposite convention
        step *= 2

    # Exact PyTorch semantics: x / max(||x||_2, 1e-12).
    norm = jnp.sqrt(sumsq)
    pred_n = pred / jnp.maximum(norm, 1e-12)
    diff = jnp.abs(pred_n - tgt)

    # Vector accumulate only (VPU adds over vregs); the single cross-lane /
    # cross-sublane reduce is deferred to the finalize branch.
    acc_ref[...] += jnp.sum(diff.reshape(block_rows // 8, 8, 128), axis=0)

    @pl.when(i == pl.num_programs(0) - 1)
    def _finalize():
        s = scalars_ref[0]                        # sq
        inv_count = scalars_ref[1]                # 1 / (B * D)
        loss_q = jnp.sum(acc_ref[...]) * inv_count
        loss_ref[0, 0] = jnp.exp(-s) * loss_q + s
        loss_q_ref[0, 0] = loss_q


def pose_loss_pallas(pred_q, target_q, sq, *, block_rows=8192):
    """PoseLoss.forward via a Pallas TPU kernel.  Returns (loss, loss_q)."""
    B, D = pred_q.shape
    if D & (D - 1) or D > 128:
        raise ValueError("component dimension must be a power of two <= 128")

    n = B * D
    rows = pl.cdiv(n, 128)                        # lane-flat rows (32 samples/row for D=4)

    # Free contiguous reshapes; a copy is only made when B*D % 128 != 0.
    pred_flat = pred_q.reshape(-1)
    tgt_flat = target_q.reshape(-1)
    pad = rows * 128 - n
    if pad:
        pred_flat = jnp.pad(pred_flat, (0, pad))  # zero quads -> contribute 0
        tgt_flat = jnp.pad(tgt_flat, (0, pad))
    pred2 = pred_flat.reshape(rows, 128)
    tgt2 = tgt_flat.reshape(rows, 128)

    # Tile selection: big tiles amortise per-step overhead; clamp to the data.
    block_rows = max(8, min(int(block_rows), pl.cdiv(rows, 8) * 8))
    block_rows = max(8, block_rows - block_rows % 8)
    grid_steps = pl.cdiv(rows, block_rows)
    mask_tail = (rows % block_rows) != 0

    sq_scalar = jnp.asarray(sq, jnp.float32).reshape(())
    scalars = jnp.stack(
        [sq_scalar, jnp.asarray(1.0 / float(B * D), jnp.float32)])

    block_bytes = block_rows * 128 * pred2.dtype.itemsize
    vmem_limit = int(min(112 * 1024 * 1024, 4 * block_bytes + (8 << 20)))

    kernel = functools.partial(
        _pose_loss_kernel, total_rows=rows, block_rows=block_rows, dim=D,
        mask_tail=mask_tail)

    cost = pl.CostEstimate(
        flops=12 * n,
        transcendentals=2 * n,
        bytes_accessed=(pred2.size + tgt2.size) * pred2.dtype.itemsize + 16,
    )

    loss, loss_q = pl.pallas_call(
        kernel,
        grid=(grid_steps,),
        out_shape=(
            jax.ShapeDtypeStruct((1, 1), jnp.float32),
            jax.ShapeDtypeStruct((1, 1), jnp.float32),
        ),
        in_specs=[
            pl.BlockSpec(memory_space=pltpu.MemorySpace.SMEM),     # [sq, 1/(B*D)]
            pl.BlockSpec((block_rows, 128), lambda i: (i, 0)),     # pred (lane-flat)
            pl.BlockSpec((block_rows, 128), lambda i: (i, 0)),     # target
        ],
        out_specs=(
            pl.BlockSpec(memory_space=pltpu.MemorySpace.SMEM),     # loss
            pl.BlockSpec(memory_space=pltpu.MemorySpace.SMEM),     # loss_q
        ),
        scratch_shapes=[pltpu.VMEM((8, 128), jnp.float32)],        # vector acc
        compiler_params=pltpu.CompilerParams(
            dimension_semantics=("arbitrary",),
            vmem_limit_bytes=vmem_limit),
        cost_estimate=cost,
    )(scalars, pred2, tgt2)

    return loss[0, 0], loss_q[0, 0]


def pose_loss_reference(pred_q, target_q, sq):
    """Pure-JAX reference matching the PyTorch module exactly."""
    pred = pred_q.astype(jnp.float32)
    tgt = target_q.astype(jnp.float32)
    norm = jnp.sqrt(jnp.sum(pred * pred, axis=1, keepdims=True))
    pred_n = pred / jnp.maximum(norm, 1e-12)
    loss_q = jnp.mean(jnp.abs(pred_n - tgt))
    s = jnp.asarray(sq, jnp.float32).reshape(())
    return jnp.exp(-s) * loss_q + s, loss_q


def pose_loss(pred_q, target_q, sq, *, block_rows=8192, min_kernel_batch=4096):
    """Public entry: tiny batches go to the fused pure-JAX path (a pallas_call
    launch costs more than the whole computation there)."""
    if pred_q.shape[0] < min_kernel_batch:
        return pose_loss_reference(pred_q, target_q, sq)
    return pose_loss_pallas(pred_q, target_q, sq, block_rows=block_rows)


def _check(got, want, what):
    assert jnp.allclose(got, want, rtol=1e-5, atol=1e-6), (what, got, want)


if __name__ == "__main__":
    key = jax.random.PRNGKey(0)

    # --- Case 1: tiny batch (typical module usage), single grid step. -------
    k1, k2 = jax.random.split(key)
    B, D = 8, 4
    pred_q = jax.random.normal(k1, (B, D), dtype=jnp.float32)
    t_raw = jax.random.normal(k2, (B, D), dtype=jnp.float32)
    target_q = t_raw / jnp.linalg.norm(t_raw, axis=1, keepdims=True)
    sq = jnp.array([0.0], dtype=jnp.float32)         # PoseLoss default sq=0.0

    loss, loss_q = pose_loss_pallas(pred_q, target_q, sq)
    loss = jax.block_until_ready(loss)
    loss_q = jax.block_until_ready(loss_q)
    ref_loss, ref_loss_q = pose_loss_reference(pred_q, target_q, sq)
    _check(loss, ref_loss, "case1 loss")
    _check(loss_q, ref_loss_q, "case1 loss_q")

    # --- Case 2: B not a multiple of 32, tiny block -> multi-step grid with a
    # masked partial tail block and a small flat zero-pad. --------------------
    k3, k4 = jax.random.split(jax.random.PRNGKey(1))
    B2 = 300
    pred_q2 = jax.random.normal(k3, (B2, D), dtype=jnp.float32)
    t_raw2 = jax.random.normal(k4, (B2, D), dtype=jnp.float32)
    target_q2 = t_raw2 / jnp.linalg.norm(t_raw2, axis=1, keepdims=True)
    sq2 = jnp.array([-0.3], dtype=jnp.float32)

    loss2, loss_q2 = pose_loss_pallas(pred_q2, target_q2, sq2, block_rows=8)
    loss2 = jax.block_until_ready(loss2)
    loss_q2 = jax.block_until_ready(loss_q2)
    ref_loss2, ref_loss_q2 = pose_loss_reference(pred_q2, target_q2, sq2)
    _check(loss2, ref_loss2, "case2 loss")
    _check(loss_q2, ref_loss_q2, "case2 loss_q")

    # --- Case 3: bf16 inputs (no wrapper cast), exact row fit, no masking. ---
    k5, k6 = jax.random.split(jax.random.PRNGKey(2))
    B3 = 256
    pred_q3 = jax.random.normal(k5, (B3, D), dtype=jnp.bfloat16)
    t_raw3 = jax.random.normal(k6, (B3, D), dtype=jnp.float32)
    target_q3 = (t_raw3 / jnp.linalg.norm(t_raw3, axis=1, keepdims=True)
                 ).astype(jnp.bfloat16)
    sq3 = jnp.array([0.5], dtype=jnp.float32)

    loss3, loss_q3 = pose_loss_pallas(pred_q3, target_q3, sq3, block_rows=8)
    loss3 = jax.block_until_ready(loss3)
    loss_q3 = jax.block_until_ready(loss_q3)
    ref_loss3, ref_loss_q3 = pose_loss_reference(pred_q3, target_q3, sq3)
    _check(loss3, ref_loss3, "case3 loss")
    _check(loss_q3, ref_loss_q3, "case3 loss_q")

    # --- Dispatch wrapper sanity (small B -> pure-JAX path). -----------------
    dl, dq = pose_loss(pred_q, target_q, sq)
    _check(jax.block_until_ready(dl), ref_loss, "dispatch loss")
    _check(jax.block_until_ready(dq), ref_loss_q, "dispatch loss_q")

    print("KERNEL_OK")
</pallas_src>

<mosaic_0001>
module attributes {stable_mosaic.version = 11 : i64} {
  func.func @_pose_loss_kernel(%arg0: i32, %arg1: memref<2xf32, #tpu.memory_space<smem>>, %arg2: memref<8x128xf32, #tpu.memory_space<vmem>>, %arg3: memref<8x128xf32, #tpu.memory_space<vmem>>, %arg4: memref<1x1xf32, #tpu.memory_space<smem>>, %arg5: memref<1x1xf32, #tpu.memory_space<smem>>, %arg6: memref<8x128xf32, #tpu.memory_space<vmem>>) attributes {dimension_semantics = [#tpu.dimension_semantics<arbitrary>], iteration_bounds = array<i64: 1>, scalar_prefetch = 0 : i64, scratch_operands = 1 : i64, tpu.core_type = #tpu.core_type<tc>, window_params = [{transform_indices = @transform_0, window_bounds = array<i64: 2>}, {transform_indices = @transform_1, window_bounds = array<i64: 8, 128>}, {transform_indices = @transform_2, window_bounds = array<i64: 8, 128>}, {transform_indices = @transform_3, window_bounds = array<i64: 1, 1>}, {transform_indices = @transform_4, window_bounds = array<i64: 1, 1>}]} {
    %c0_i32 = arith.constant 0 : i32
    %0 = arith.cmpi eq, %arg0, %c0_i32 : i32
    %1 = arith.extui %0 : i1 to i32
    %c0_i32_0 = arith.constant 0 : i32
    %2 = arith.cmpi ne, %1, %c0_i32_0 : i32
    scf.if %2 {
      %cst_31 = arith.constant 0.000000e+00 : f32
      %88 = vector.broadcast %cst_31 : f32 to vector<8x128xf32>
      %c0_32 = arith.constant 0 : index
      %c0_33 = arith.constant 0 : index
      %89 = vector.load %arg6[%c0_32, %c0_33] : memref<8x128xf32, #tpu.memory_space<vmem>>, vector<8x128xf32>
      tpu.vector_store %arg6[%c0_32, %c0_33], %88 {strides = array<i32>} : memref<8x128xf32, #tpu.memory_space<vmem>>, vector<8x128xf32>,
    } else {
    }
    %c0 = arith.constant 0 : index
    %c0_1 = arith.constant 0 : index
    %3 = vector.load %arg2[%c0, %c0_1] : memref<8x128xf32, #tpu.memory_space<vmem>>, vector<8x128xf32>
    %c0_2 = arith.constant 0 : index
    %c0_3 = arith.constant 0 : index
    %4 = vector.load %arg3[%c0_2, %c0_3] : memref<8x128xf32, #tpu.memory_space<vmem>>, vector<8x128xf32>
    %5 = tpu.iota {dimensions = array<i32: 0>} : vector<8x128xi32>
    %c8_i32 = arith.constant 8 : i32
    %6 = arith.muli %arg0, %c8_i32 : i32
    %7 = vector.broadcast %6 : i32 to vector<8x128xi32>
    %8 = arith.addi %5, %7 : vector<8x128xi32>
    %c1_i32 = arith.constant 1 : i32
    %9 = vector.broadcast %c1_i32 : i32 to vector<8x128xi32>
    %10 = arith.cmpi slt, %8, %9 : vector<8x128xi32>
    %cst = arith.constant 0.000000e+00 : f32
    %11 = vector.broadcast %cst : f32 to vector<8x128xf32>
    %12 = arith.select %10, %3, %11 : vector<8x128xi1>, vector<8x128xf32>
    %cst_4 = arith.constant 0.000000e+00 : f32
    %13 = vector.broadcast %cst_4 : f32 to vector<8x128xf32>
    %14 = arith.select %10, %4, %13 : vector<8x128xi1>, vector<8x128xf32>
    %15 = tpu.iota {dimensions = array<i32: 1>} : vector<8x128xi32>
    %16 = tpu.iota {dimensions = array<i32: 1>} : vector<8x128xi32>
    %c1_i32_5 = arith.constant 1 : i32
    %17 = tpu.dynamic_rotate %16 by %c1_i32_5 dim 1 : vector<8x128xi32>, i32 -> vector<8x128xi32>
    %18 = vector.extract_strided_slice %17 {offsets = [0, 0], sizes = [1, 1], strides = [1, 1]} : vector<8x128xi32> to vector<1x1xi32>
    %c127_i32 = arith.constant 127 : i32
    %19 = vector.broadcast %c127_i32 : i32 to vector<1x1xi32>
    %20 = arith.cmpi eq, %18, %19 : vector<1x1xi32>
    %21 = arith.mulf %12, %12 : vector<8x128xf32>
    %c127_i32_6 = arith.constant 127 : i32
    %22 = tpu.dynamic_rotate %21 by %c127_i32_6 dim 1 : vector<8x128xf32>, i32 -> vector<8x128xf32>
    %c1_i32_7 = arith.constant 1 : i32
    %23 = tpu.dynamic_rotate %21 by %c1_i32_7 dim 1 : vector<8x128xf32>, i32 -> vector<8x128xf32>
    %c2_i32 = arith.constant 2 : i32
    %c0_i32_8 = arith.constant 0 : i32
    %24 = arith.cmpi eq, %c2_i32, %c0_i32_8 : i32
    %c1_i32_9 = arith.constant 1 : i32
    %25 = arith.select %24, %c1_i32_9, %c2_i32 : i32
    %26 = vector.broadcast %25 : i32 to vector<8x128xi32>
    %27 = arith.remsi %15, %26 : vector<8x128xi32>
    %c0_i32_10 = arith.constant 0 : i32
    %28 = vector.broadcast %c0_i32_10 : i32 to vector<8x128xi32>
    %29 = arith.cmpi ne, %27, %28 : vector<8x128xi32>
    %c0_i32_11 = arith.constant 0 : i32
    %30 = vector.broadcast %c0_i32_11 : i32 to vector<8x128xi32>
    %31 = arith.cmpi slt, %27, %30 : vector<8x128xi32>
    %c0_i32_12 = arith.constant 0 : i32
    %32 = arith.cmpi slt, %25, %c0_i32_12 : i32
    %33 = vector.broadcast %32 : i1 to vector<8x128xi1>
    %34 = vector.broadcast %33 : vector<8x128xi1> to vector<8x128xi1>
    %35 = arith.xori %31, %34 : vector<8x128xi1>
    %36 = arith.andi %35, %29 : vector<8x128xi1>
    %37 = vector.broadcast %25 : i32 to vector<8x128xi32>
    %38 = arith.addi %27, %37 : vector<8x128xi32>
    %39 = arith.select %36, %38, %27 : vector<8x128xi1>, vector<8x128xi32>
    %c1_i32_13 = arith.constant 1 : i32
    %40 = vector.broadcast %c1_i32_13 : i32 to vector<8x128xi32>
    %41 = arith.cmpi slt, %39, %40 : vector<8x128xi32>
    %42 = vector.broadcast %20 : vector<1x1xi1> to vector<8x128xi1>
    %43 = vector.broadcast %42 : vector<8x128xi1> to vector<8x128xi1>
    %44 = arith.xori %41, %43 : vector<8x128xi1>
    %cst_14 = arith.constant dense<true> : vector<8x128xi1>
    %45 = arith.xori %44, %cst_14 : vector<8x128xi1>
    %46 = arith.select %45, %22, %23 : vector<8x128xi1>, vector<8x128xf32>
    %47 = arith.addf %21, %46 : vector<8x128xf32>
    %c126_i32 = arith.constant 126 : i32
    %48 = tpu.dynamic_rotate %47 by %c126_i32 dim 1 : vector<8x128xf32>, i32 -> vector<8x128xf32>
    %c2_i32_15 = arith.constant 2 : i32
    %49 = tpu.dynamic_rotate %47 by %c2_i32_15 dim 1 : vector<8x128xf32>, i32 -> vector<8x128xf32>
    %c4_i32 = arith.constant 4 : i32
    %c0_i32_16 = arith.constant 0 : i32
    %50 = arith.cmpi eq, %c4_i32, %c0_i32_16 : i32
    %c1_i32_17 = arith.constant 1 : i32
    %51 = arith.select %50, %c1_i32_17, %c4_i32 : i32
    %52 = vector.broadcast %51 : i32 to vector<8x128xi32>
    %53 = arith.remsi %15, %52 : vector<8x128xi32>
    %c0_i32_18 = arith.constant 0 : i32
    %54 = vector.broadcast %c0_i32_18 : i32 to vector<8x128xi32>
    %55 = arith.cmpi ne, %53, %54 : vector<8x128xi32>
    %c0_i32_19 = arith.constant 0 : i32
    %56 = vector.broadcast %c0_i32_19 : i32 to vector<8x128xi32>
    %57 = arith.cmpi slt, %53, %56 : vector<8x128xi32>
    %c0_i32_20 = arith.constant 0 : i32
    %58 = arith.cmpi slt, %51, %c0_i32_20 : i32
    %59 = vector.broadcast %58 : i1 to vector<8x128xi1>
    %60 = vector.broadcast %59 : vector<8x128xi1> to vector<8x128xi1>
    %61 = arith.xori %57, %60 : vector<8x128xi1>
    %62 = arith.andi %61, %55 : vector<8x128xi1>
    %63 = vector.broadcast %51 : i32 to vector<8x128xi32>
    %64 = arith.addi %53, %63 : vector<8x128xi32>
    %65 = arith.select %62, %64, %53 : vector<8x128xi1>, vector<8x128xi32>
    %c2_i32_21 = arith.constant 2 : i32
    %66 = vector.broadcast %c2_i32_21 : i32 to vector<8x128xi32>
    %67 = arith.cmpi slt, %65, %66 : vector<8x128xi32>
    %68 = vector.broadcast %20 : vector<1x1xi1> to vector<8x128xi1>
    %69 = vector.broadcast %68 : vector<8x128xi1> to vector<8x128xi1>
    %70 = arith.xori %67, %69 : vector<8x128xi1>
    %cst_22 = arith.constant dense<true> : vector<8x128xi1>
    %71 = arith.xori %70, %cst_22 : vector<8x128xi1>
    %72 = arith.select %71, %48, %49 : vector<8x128xi1>, vector<8x128xf32>
    %73 = arith.addf %47, %72 : vector<8x128xf32>
    %74 = math.sqrt %73 : vector<8x128xf32>
    %cst_23 = arith.constant 9.99999996E-13 : f32
    %75 = vector.broadcast %cst_23 : f32 to vector<8x128xf32>
    %76 = arith.maximumf %74, %75 : vector<8x128xf32>
    %77 = arith.divf %12, %76 : vector<8x128xf32>
    %78 = arith.subf %77, %14 : vector<8x128xf32>
    %79 = math.absf %78 : vector<8x128xf32>
    %c0_24 = arith.constant 0 : index
    %c0_25 = arith.constant 0 : index
    %80 = vector.load %arg6[%c0_24, %c0_25] : memref<8x128xf32, #tpu.memory_space<vmem>>, vector<8x128xf32>
    %81 = vector.shape_cast %79 : vector<8x128xf32> to vector<1x8x128xf32>
    %cst_26 = arith.constant dense<0.000000e+00> : vector<8x128xf32>
    %82 = vector.multi_reduction <add>, %81, %cst_26 [0] : vector<1x8x128xf32> to vector<8x128xf32>
    %83 = arith.addf %80, %82 : vector<8x128xf32>
    %c0_27 = arith.constant 0 : index
    %c0_28 = arith.constant 0 : index
    %84 = vector.load %arg6[%c0_27, %c0_28] : memref<8x128xf32, #tpu.memory_space<vmem>>, vector<8x128xf32>
    tpu.vector_store %arg6[%c0_27, %c0_28], %83 {strides = array<i32>} : memref<8x128xf32, #tpu.memory_space<vmem>>, vector<8x128xf32>,
    %c0_i32_29 = arith.constant 0 : i32
    %85 = arith.cmpi eq, %arg0, %c0_i32_29 : i32
    %86 = arith.extui %85 : i1 to i32
    %c0_i32_30 = arith.constant 0 : i32
    %87 = arith.cmpi ne, %86, %c0_i32_30 : i32
    scf.if %87 {
      %c0_31 = arith.constant 0 : index
      %88 = memref.load %arg1[%c0_31] : memref<2xf32, #tpu.memory_space<smem>>
      %c1 = arith.constant 1 : index
      %89 = memref.load %arg1[%c1] : memref<2xf32, #tpu.memory_space<smem>>
      %c0_32 = arith.constant 0 : index
      %c0_33 = arith.constant 0 : index
      %90 = vector.load %arg6[%c0_32, %c0_33] : memref<8x128xf32, #tpu.memory_space<vmem>>, vector<8x128xf32>
      %91 = vector.shape_cast %90 : vector<8x128xf32> to vector<1x8x128xf32>
      %cst_34 = arith.constant dense<0.000000e+00> : vector<1xf32>
      %92 = vector.multi_reduction <add>, %91, %cst_34 [1, 2] : vector<1x8x128xf32> to vector<1xf32>
      %93 = vector.shape_cast %92 : vector<1xf32> to vector<1x1x1xf32>
      %94 = vector.extract %93[0, 0, 0] : f32 from vector<1x1x1xf32>
      %95 = arith.mulf %94, %89 : f32
      %cst_35 = arith.constant 0.000000e+00 : f32
      %96 = arith.subf %cst_35, %88 : f32
      %97 = math.exp %96 : f32
      %98 = arith.mulf %97, %95 : f32
      %99 = arith.addf %98, %88 : f32
      %c0_36 = arith.constant 0 : index
      %c0_37 = arith.constant 0 : index
      %100 = memref.load %arg4[%c0_36, %c0_37] : memref<1x1xf32, #tpu.memory_space<smem>>
      memref.store %99, %arg4[%c0_36, %c0_37] : memref<1x1xf32, #tpu.memory_space<smem>>
      %c0_38 = arith.constant 0 : index
      %c0_39 = arith.constant 0 : index
      %101 = memref.load %arg5[%c0_38, %c0_39] : memref<1x1xf32, #tpu.memory_space<smem>>
      memref.store %95, %arg5[%c0_38, %c0_39] : memref<1x1xf32, #tpu.memory_space<smem>>
    } else {
    }
    return
  }
  func.func @transform_0(%arg0: i32) -> i32 {
    %c0_i32 = arith.constant 0 : i32
    %c0_i32_0 = arith.constant 0 : i32
    return %c0_i32 : i32
  }
  func.func @transform_1(%arg0: i32) -> (i32, i32) {
    %c0_i32 = arith.constant 0 : i32
    %c0_i32_0 = arith.constant 0 : i32
    return %arg0, %c0_i32 : i32, i32
  }
  func.func @transform_2(%arg0: i32) -> (i32, i32) {
    %c0_i32 = arith.constant 0 : i32
    %c0_i32_0 = arith.constant 0 : i32
    return %arg0, %c0_i32 : i32, i32
  }
  func.func @transform_3(%arg0: i32) -> (i32, i32) {
    %c0_i32 = arith.constant 0 : i32
    %c0_i32_0 = arith.constant 0 : i32
    %c0_i32_1 = arith.constant 0 : i32
    return %c0_i32, %c0_i32_0 : i32, i32
  }
  func.func @transform_4(%arg0: i32) -> (i32, i32) {
    %c0_i32 = arith.constant 0 : i32
    %c0_i32_0 = arith.constant 0 : i32
    %c0_i32_1 = arith.constant 0 : i32
    return %c0_i32, %c0_i32_0 : i32, i32
  }
}

</mosaic_0001>

<llo_original>
// kernel: tpu_custom_call.1
$region0: #{tpu_custom_call.1}
  #allocation0 [shape = 'u32[]', space=smem, size = 0x4, offset = 0x4, fixed_abs, tag = 'smem constant byte address 0x4 - core index']
  #allocation1 [shape = 'u32[72,128]{1,0:T(1,128)}', space=vmem, size = 0x9000, scoped, tag = 'internal scratch']
  #allocation2 [shape = 'f32[8,128]{1,0:T(8,128)}', space=vmem, size = 0x1000, scoped, tag = 'scratch operand']
  %s0 = inlined_call_operand.hbm [shape: f32[2], index: 0, kind: input, shape index: {}]
  %s1 = inlined_call_operand.hbm [shape: f32[1,128], index: 1, kind: input, shape index: {}]
  %s2 = inlined_call_operand.vmem [shape: f32[1,128], index: 2, kind: input, shape index: {}]
  %s3 = inlined_call_operand.hbm [shape: f32[1,1], index: 3, kind: output, shape index: {0}]
  %s4 = inlined_call_operand.hbm [shape: f32[1,1], index: 4, kind: output, shape index: {1}]
  %5 = xla_tuple %s3, %s4
  %s6 = sld [smem:[#allocation0]]
  $region46: #{tpu_custom_call.1} parent=0
    _
  %s8 = ssub.s32 1, %s6
  %s9 = scalar_select 0, %s8, %s6
  $region1: #{tpu_custom_call.1} parent=0
    #allocation3 [shape = 'u8[512]{0}', space=smem, size = 0x200, scoped, tag = 'input window, operand 0, single buffered']
    #allocation4 [shape = 's32[1]{0}', space=sflag, size = 0x4, scoped, tag = 'scoped memory for tpu_custom_call.1']
    #allocation5 [shape = 's32[1]{0}', space=sflag, size = 0x4, scoped, tag = 'scoped memory for tpu_custom_call.1']
    #allocation6 [shape = 's32[1]{0}', space=sflag, size = 0x4, scoped, tag = 'scoped memory for tpu_custom_call.1']
    #allocation7 [shape = 'u8[4096]{0}', space=vmem, size = 0x1000, scoped, tag = 'input window, operand 1, single buffered']
    #allocation8 [shape = 'u8[512]{0}', space=smem, size = 0x200, scoped, tag = 'output window, operand 0, single buffered']
    #allocation9 [shape = 'u8[512]{0}', space=smem, size = 0x200, scoped, tag = 'output window, operand 1, single buffered']
    #allocation10 [shape = 's32[1]{0}', space=sflag, size = 0x4, scoped, tag = 'scoped memory for tpu_custom_call.1']
    %10 = vsyncpa [#allocation5], 0
    %11 = vsyncpa [#allocation4], 0
    %12 = vsyncpa [#allocation6], 0
    %13 = vsyncpa [#allocation10], 0
    // Predicated region
    $region2: #{tpu_custom_call.1} parent=1 // pred_check
      _
    $region3: #{tpu_custom_call.1} parent=1 // pred_check_branch
      %15 = sbr.rel (0) target = $region5
    $region4: #{tpu_custom_call.1} parent=1 // pred_region
      %17 = vsyncadd [#allocation5], 0
      %s19 = sshll.u32 %s0, 4
      %s20 = int_to_ptr.hbm [resolvable:$true] %s19
      %22 = dma.hbm_to_smem %s20, 16, [#allocation3], [#allocation5]
    $region5: #{tpu_custom_call.1} parent=1 // pred_fallthru
      _
    // Predicated region
    $region6: #{tpu_custom_call.1} parent=1 // pred_check
      _
    $region7: #{tpu_custom_call.1} parent=1 // pred_check_branch
      %24 = sbr.rel (0) target = $region9
    $region8: #{tpu_custom_call.1} parent=1 // pred_region
      %26 = vsyncadd [#allocation4], 112
      %s27 = sshll.u32 %s1, 4
      %s28 = int_to_ptr.hbm [resolvable:$true] %s27
      %s29 = sshll.u32 [#allocation7], 4
      %s30 = int_to_ptr.vmem [resolvable:$true] %s29
      %35 = dma.hbm_to_vmem [thread:$0]  %s28, 16, %s30, [#allocation4], 16, 16, 1
    $region9: #{tpu_custom_call.1} parent=1 // pred_fallthru
      _
    // Predicated region
    $region10: #{tpu_custom_call.1} parent=1 // pred_check
      _
    $region11: #{tpu_custom_call.1} parent=1 // pred_check_branch
      %37 = sbr.rel (0) target = $region13
    $region12: #{tpu_custom_call.1} parent=1 // pred_region
      _
    $region13: #{tpu_custom_call.1} parent=1 // pred_fallthru
      _
    // Predicated region
    $region14: #{tpu_custom_call.1} parent=1 // pred_check
      _
    $region15: #{tpu_custom_call.1} parent=1 // pred_check_branch
      %39 = sbr.rel (0) target = $region17
    $region16: #{tpu_custom_call.1} parent=1 // pred_region
      %41 = dma.done [#allocation5], 16
    $region17: #{tpu_custom_call.1} parent=1 // pred_fallthru
      _
    // Predicated region
    $region18: #{tpu_custom_call.1} parent=1 // pred_check
      _
    $region19: #{tpu_custom_call.1} parent=1 // pred_check_branch
      %43 = sbr.rel (0) target = $region21
    $region20: #{tpu_custom_call.1} parent=1 // pred_region
      %45 = dma.done [#allocation4], 128
    $region21: #{tpu_custom_call.1} parent=1 // pred_fallthru
      _
    %46 = sfence
    %p47 = scmp.eq.s32.totalorder 0, 0
    // Predicated region
    $region22: #{tpu_custom_call.1} parent=1 // pred_check
      %p48 = pneg %p47
    $region23: #{tpu_custom_call.1} parent=1 // pred_check_branch
      %50 = sbr.rel (%p48) target = $region25
    $region24: #{tpu_custom_call.1} parent=1 // pred_region
      %51 = vst [vmem:[#allocation2] sm:$0xff] 0.0
    $region25: #{tpu_custom_call.1} parent=1 // pred_fallthru
      _
    %v52 = vld [vmem:[#allocation7] sm:$0xff]
    %v53 = vld [vmem:[%s2] sm:$0xff]
    %v54 = vlaneseq
    %v55 = vshrl.u32 %v54, 7
    %s56 = smul.u32 0, 8
    %v57 = vstv %s56
    %v58 = vadd.s32 %v55, %v57
    %vm59 = vcmp.lt.s32.totalorder %v58, 1
    %v60 = vsel %vm59, %v52, 0.0
    %v61 = vsel %vm59, %v53, 0.0
    %v62 = vlaneseq
    %v63 = vand.u32 %v62, 127
    %64 = vrot.lane.b32.xlu0 %v63, 1
    %v65 = vpop.permute.xlu0 %64
    %vm66 = vcmp.eq.s32.totalorder %v65, 127
    %v67 = vmul.f32 %v60, %v60
    %68 = vrot.lane.b32.xlu0 %v67, 127
    %v69 = vpop.permute.xlu0 %68
    %70 = vrot.lane.b32.xlu0 %v67, 1
    %v71 = vpop.permute.xlu0 %70
    %vm72 = vcmp.lt.s32.totalorder %v63, 0
    %v73 = vsub.s32 0, %v63
    %v74 = vsel %vm72, %v73, %v63
    %v75 = vshrl.u32 %v74, 1
    %v76 = vand.u32 %v74, 1
    %v77 = vsub.s32 0, %v76
    %v78 = vsel %vm72, %v77, %v76
    %vm79 = vcmp.ne.s32.totalorder %v78, 0
    %vm80 = vcmp.lt.s32.totalorder %v78, 0
    %vm81 = vmand %vm80, %vm79
    %v82 = vadd.s32 %v78, 2
    %v83 = vsel %vm81, %v82, %v78
    %vm84 = vcmp.lt.s32.totalorder %v83, 1
    %v85 = vsel %vm66, 1, 0
    %s86 = vtos %v85
    %v87 = vstv %s86
    %vm88 = vcmp.eq.s32.totalorder %v87, 1
    %vm89 = vmxor %vm84, %vm88
    %vm90 = vmxor %vm89, 1
    %v91 = vsel %vm90, %v69, %v71
    %v92 = vadd.f32 %v67, %v91
    %93 = vrot.lane.b32.xlu0 %v92, 126
    %v94 = vpop.permute.xlu0 %93
    %95 = vrot.lane.b32.xlu0 %v92, 2
    %v96 = vpop.permute.xlu0 %95
    %vm97 = vcmp.lt.s32.totalorder %v63, 0
    %v98 = vsub.s32 0, %v63
    %v99 = vsel %vm97, %v98, %v63
    %v100 = vshrl.u32 %v99, 2
    %v101 = vand.u32 %v99, 3
    %v102 = vsub.s32 0, %v101
    %v103 = vsel %vm97, %v102, %v101
    %vm104 = vcmp.ne.s32.totalorder %v103, 0
    %vm105 = vcmp.lt.s32.totalorder %v103, 0
    %vm106 = vmand %vm105, %vm104
    %v107 = vadd.s32 %v103, 4
    %v108 = vsel %vm106, %v107, %v103
    %vm109 = vcmp.lt.s32.totalorder %v108, 2
    %vm110 = vmxor %vm109, %vm88
    %vm111 = vmxor %vm110, 1
    %v112 = vsel %vm111, %v94, %v96
    %v113 = vadd.f32 %v92, %v112
    %v114 = vrsqrt.pop %v113
    %v115 = vmul.f32 %v114, %v113
    %v116 = vmul.f32 %v115, %v114
    %v117 = vmul.f32 0.5, %v116
    %v118 = vsub.f32 1.5, %v117
    %v119 = vmul.f32 %v114, %v118
    %v120 = vmul.f32 %v113, %v119
    %vm121 = vcmp.eq.f32.partialorder %v113, inf
    %v122 = vsel %vm121, %v113, %v120
    %vm123 = vcmp.eq.f32.partialorder %v113, 0.0
    %v124 = vand.u32 %v113, 2147483648
    %v125 = vsel %vm123, %v124, %v122
    %v126 = vmax.f32 %v125, 1e-12
    %v127 = vrcp.pop %v126
    %v128 = vmul.f32 %v126, %v127
    %v129 = vsub.f32 1.0, %v128
    %v130 = vmul.f32 %v127, %v129
    %v131 = vadd.f32 %v127, %v130
    %vm132 = vweird.f32 %v126
    %vm133 = vweird.f32 %v127
    %vm134 = vmor %vm132, %vm133
    %v135 = vsel %vm134, %v127, %v131
    %v136 = vand.u32 2147483647, %v126
    %vm137 = vcmp.eq.f32.partialorder %v136, 8.507059e+37
    %v138 = vand.u32 %v126, 2147483648
    %v139 = vor.u32 1.1754944e-38, %v138
    %v140 = vsel %vm137, %v139, %v135
    %v141 = vmul.f32 %v60, %v140
    %v142 = vsub.f32 %v141, %v61
    %v143 = vand.u32 2147483647, %v142
    %v144 = vld [vmem:[#allocation2] sm:$0xff]
    %v145 = vadd.f32 %v143, 0.0
    %v146 = vadd.f32 %v144, %v145
    %147 = vst [vmem:[#allocation2] sm:$0xff] %v146
    // Predicated region
    $region26: #{tpu_custom_call.1} parent=1 // pred_check
      %p148 = pneg %p47
    $region27: #{tpu_custom_call.1} parent=1 // pred_check_branch
      %150 = sbr.rel (%p148) target = $region29
    $region28: #{tpu_custom_call.1} parent=1 // pred_region
      %s151 = sld [smem:[#allocation3]]
      %s152 = sld [smem:[#allocation3 + $0x1]]
      %v153 = vld [vmem:[#allocation2] sm:$0xff]
      %154 = vadd.xlane.f32.xlu0 %v153
      %v155 = vpop.xlane.xlu0 %154
      %v156 = vrot.slane %v155, 4
      %v157 = vadd.f32 %v155, %v156
      %v158 = vrot.slane %v157, 2
      %v159 = vadd.f32 %v157, %v158
      %v160 = vrot.slane %v159, 1
      %v161 = vadd.f32 %v159, %v160
      %s162 = vtos %v161
      %s163 = smul.f32 %s162, %s152
      %s164 = ssub.f32 0.0, %s151
      %v165 = vstv %s164
      %v166 = vmul.f32 %v165, 1.442695
      %v167 = vpow.pop %v166
      %s168 = vtos %v167
      %s169 = smul.f32 %s168, %s163
      %s170 = sadd.f32 %s169, %s151
      %s171 = scalar_lea.smem [#allocation8], 0
      %172 = sst [smem:[%s171]] %s170
      %s173 = scalar_lea.smem [#allocation9], 0
      %174 = sst [smem:[%s173]] %s163
    $region29: #{tpu_custom_call.1} parent=1 // pred_fallthru
      _
    // Predicated region
    $region30: #{tpu_custom_call.1} parent=1 // pred_check
      _
    $region31: #{tpu_custom_call.1} parent=1 // pred_check_branch
      %176 = sbr.rel (0) target = $region33
    $region32: #{tpu_custom_call.1} parent=1 // pred_region
      %178 = vsyncadd [#allocation6], 0
      %s180 = sshll.u32 %s3, 4
      %s181 = int_to_ptr.hbm [resolvable:$true] %s180
      %183 = dma.smem_to_hbm [#allocation8], 16, %s181, [#allocation6]
    $region33: #{tpu_custom_call.1} parent=1 // pred_fallthru
      _
    // Predicated region
    $region34: #{tpu_custom_call.1} parent=1 // pred_check
      _
    $region35: #{tpu_custom_call.1} parent=1 // pred_check_branch
      %185 = sbr.rel (0) target = $region37
    $region36: #{tpu_custom_call.1} parent=1 // pred_region
      %187 = vsyncadd [#allocation10], 0
      %s189 = sshll.u32 %s4, 4
      %s190 = int_to_ptr.hbm [resolvable:$true] %s189
      %192 = dma.smem_to_hbm [#allocation9], 16, %s190, [#allocation10]
    $region37: #{tpu_custom_call.1} parent=1 // pred_fallthru
      _
    // Predicated region
    $region38: #{tpu_custom_call.1} parent=1 // pred_check
      _
    $region39: #{tpu_custom_call.1} parent=1 // pred_check_branch
      %194 = sbr.rel (0) target = $region41
    $region40: #{tpu_custom_call.1} parent=1 // pred_region
      %196 = dma.done [#allocation6], 16
    $region41: #{tpu_custom_call.1} parent=1 // pred_fallthru
      _
    // Predicated region
    $region42: #{tpu_custom_call.1} parent=1 // pred_check
      _
    $region43: #{tpu_custom_call.1} parent=1 // pred_check_branch
      %198 = sbr.rel (0) target = $region45
    $region44: #{tpu_custom_call.1} parent=1 // pred_region
      %200 = dma.done [#allocation10], 16
    $region45: #{tpu_custom_call.1} parent=1 // pred_fallthru
      _
    %201 = sfence
    %202 = vsyncpa [#allocation4], 1
    %203 = vsyncpa [#allocation5], 1
    %204 = vsyncpa [#allocation6], 1
    %205 = vsyncpa [#allocation10], 1

</llo_original>
